<compile_context>
chip_gen: v7x
topology: tpu7x:2x2x1
jax: 0.10.0
libtpu: 0.0.40
codegen_flags: <defaults>
</compile_context>

<pallas_src>
import math

import jax
import jax.numpy as jnp
from jax.experimental import pallas as pl
from jax.experimental.pallas import tpu as pltpu


def _round_up(x, m):
    return (x + m - 1) // m * m


# --------------------------------------------------------------------------------------
# Kernel 1:  G[i] = dropout(relu( (sum_k A[i,k] @ X[k]) @ W1 + b1 )) @ W2
# --------------------------------------------------------------------------------------
def _gcn_layer1_kernel(a_ref, x_ref, w1_ref, b1_ref, w2_ref, mask_ref, g_ref, acc_ref):
    k = pl.program_id(1)

    @pl.when(k == 0)
    def _():
        acc_ref[...] = jnp.zeros_like(acc_ref)

    # Reassociated layer 1: accumulate (A @ X) at width F (cheaper than width D when F <= D).
    acc_ref[...] += jnp.dot(a_ref[...], x_ref[...],
                            preferred_element_type=jnp.float32)

    @pl.when(k == pl.num_programs(1) - 1)
    def _():
        ax = acc_ref[...].astype(jnp.bfloat16)                       # [TM, Fp] -> MXU operand
        h = jnp.dot(ax, w1_ref[...], preferred_element_type=jnp.float32)
        h = h + b1_ref[...]                                          # f32 bias
        h = jnp.maximum(h, 0.0) * mask_ref[...]                      # fused ReLU + dropout scale
        g = jnp.dot(h.astype(jnp.bfloat16), w2_ref[...],             # fold in W2 so layer 2 is
                    preferred_element_type=jnp.float32)              # a pure A @ G reduction
        g_ref[...] = g.astype(g_ref.dtype)


# --------------------------------------------------------------------------------------
# Kernel 2:  out[i] = (sum_k A[i,k] @ G[k]) + b2
# --------------------------------------------------------------------------------------
def _gcn_layer2_kernel(a_ref, g_ref, b2_ref, o_ref, acc_ref):
    k = pl.program_id(1)

    @pl.when(k == 0)
    def _():
        acc_ref[...] = jnp.zeros_like(acc_ref)

    acc_ref[...] += jnp.dot(a_ref[...], g_ref[...],
                            preferred_element_type=jnp.float32)

    @pl.when(k == pl.num_programs(1) - 1)
    def _():
        o_ref[...] = (acc_ref[...] + b2_ref[...]).astype(o_ref.dtype)


# --------------------------------------------------------------------------------------
# Wrapper mirroring EncoderFeedForward.forward(batch, x, edge_index, edge_weight)
# --------------------------------------------------------------------------------------
def encoder_feed_forward(batch, x, edge_index, params, *, dropout_p, rng_key,
                         edge_weight=None, training=True, tm=128, tk=128):
    del batch  # unused by the reference forward
    n, f = x.shape
    w1, b1, w2, b2 = params
    d = w1.shape[1]
    o = w2.shape[1]

    # ---------- glue: dense normalized adjacency A_hat = D^-1/2 (A + I) D^-1/2 ----------
    if edge_weight is None:
        edge_weight = jnp.ones((edge_index.shape[1],), dtype=jnp.float32)
    adj = jnp.zeros((n, n), dtype=jnp.float32)
    adj = adj.at[edge_index[0], edge_index[1]].add(edge_weight)
    adj = adj + jnp.eye(n, dtype=jnp.float32)
    deg = jnp.sum(adj, axis=1)
    dinv = jnp.where(deg > 0, jax.lax.rsqrt(deg), 0.0)
    a_hat = adj * dinv[:, None] * dinv[None, :]

    # ---------- pad to lane-dense (128) feature dims and tile-aligned node dim ----------
    n_pad = _round_up(n, math.lcm(tm, tk))
    f_pad = _round_up(f, 128)
    d_pad = _round_up(d, 128)
    o_pad = _round_up(o, 128)

    a_p = jnp.zeros((n_pad, n_pad), jnp.bfloat16).at[:n, :n].set(a_hat.astype(jnp.bfloat16))
    x_p = jnp.zeros((n_pad, f_pad), jnp.bfloat16).at[:n, :f].set(x.astype(jnp.bfloat16))
    w1_p = jnp.zeros((f_pad, d_pad), jnp.bfloat16).at[:f, :d].set(w1.astype(jnp.bfloat16))
    b1_p = jnp.zeros((1, d_pad), jnp.float32).at[:, :d].set(b1.astype(jnp.float32))
    w2_p = jnp.zeros((d_pad, o_pad), jnp.bfloat16).at[:d, :o].set(w2.astype(jnp.bfloat16))
    b2_p = jnp.zeros((1, o_pad), jnp.float32).at[:, :o].set(b2.astype(jnp.float32))

    # ---------- dropout scale mask, built wrapper-side (training-mode semantics) ----------
    keep_prob = 1.0 - float(dropout_p)
    if training and keep_prob < 1.0:
        keep = jax.random.bernoulli(rng_key, keep_prob, (n_pad, d_pad))
        mask = keep.astype(jnp.float32) * jnp.float32(1.0 / keep_prob)
    else:  # eval mode / p == 0: dropout is identity
        mask = jnp.ones((n_pad, d_pad), jnp.float32)

    grid = (n_pad // tm, n_pad // tk)
    cparams = pltpu.CompilerParams(
        dimension_semantics=("parallel", "arbitrary"),
        vmem_limit_bytes=32 * 1024 * 1024,   # fits v7x (64 MiB) and v5e (16 MiB default scoped)
    )

    # ---------- layer 1 + dropout + (H @ W2) ----------
    l1_flops = 2 * n_pad * n_pad * f_pad + 2 * n_pad * f_pad * d_pad + 2 * n_pad * d_pad * o_pad
    l1_bytes = int(a_p.size * 2 + x_p.size * 2 + w1_p.size * 2 + b1_p.size * 4
                   + w2_p.size * 2 + mask.size * 4 + n_pad * o_pad * 2)
    g_p = pl.pallas_call(
        _gcn_layer1_kernel,
        out_shape=jax.ShapeDtypeStruct((n_pad, o_pad), jnp.bfloat16),
        grid=grid,
        in_specs=[
            pl.BlockSpec((tm, tk), lambda i, k: (i, k)),        # A_hat row/col tile
            pl.BlockSpec((tk, f_pad), lambda i, k: (k, 0)),     # X col-tile of the reduction
            pl.BlockSpec((f_pad, d_pad), lambda i, k: (0, 0)),  # W1 (full, resident)
            pl.BlockSpec((1, d_pad), lambda i, k: (0, 0)),      # b1
            pl.BlockSpec((d_pad, o_pad), lambda i, k: (0, 0)),  # W2 (full, resident)
            pl.BlockSpec((tm, d_pad), lambda i, k: (i, 0)),     # dropout scale mask row tile
        ],
        out_specs=pl.BlockSpec((tm, o_pad), lambda i, k: (i, 0)),
        scratch_shapes=[pltpu.VMEM((tm, f_pad), jnp.float32)],
        compiler_params=cparams,
        cost_estimate=pl.CostEstimate(flops=l1_flops, transcendentals=0,
                                      bytes_accessed=l1_bytes),
    )(a_p, x_p, w1_p, b1_p, w2_p, mask)

    # ---------- layer 2: out = A_hat @ G + b2 ----------
    l2_flops = 2 * n_pad * n_pad * o_pad
    l2_bytes = int(a_p.size * 2 + n_pad * o_pad * 2 + b2_p.size * 4 + n_pad * o_pad * 4)
    out_p = pl.pallas_call(
        _gcn_layer2_kernel,
        out_shape=jax.ShapeDtypeStruct((n_pad, o_pad), jnp.float32),
        grid=grid,
        in_specs=[
            pl.BlockSpec((tm, tk), lambda i, k: (i, k)),        # A_hat row/col tile
            pl.BlockSpec((tk, o_pad), lambda i, k: (k, 0)),     # G col-tile of the reduction
            pl.BlockSpec((1, o_pad), lambda i, k: (0, 0)),      # b2
        ],
        out_specs=pl.BlockSpec((tm, o_pad), lambda i, k: (i, 0)),
        scratch_shapes=[pltpu.VMEM((tm, o_pad), jnp.float32)],
        compiler_params=cparams,
        cost_estimate=pl.CostEstimate(flops=l2_flops, transcendentals=0,
                                      bytes_accessed=l2_bytes),
    )(a_p, g_p, b2_p)

    out = out_p[:n, :o]
    return out, out   # module returns (out, out)


def init_params(key, num_features, dim, out_features):
    """Deterministic synthetic GCNConv weights (W: [in, out], b: [1, out])."""
    k1, k2 = jax.random.split(key)
    s1 = (6.0 / (num_features + dim)) ** 0.5
    s2 = (6.0 / (dim + out_features)) ** 0.5
    w1 = jax.random.uniform(k1, (num_features, dim), jnp.float32, -s1, s1)
    b1 = jnp.zeros((1, dim), jnp.float32)
    w2 = jax.random.uniform(k2, (dim, out_features), jnp.float32, -s2, s2)
    b2 = jnp.zeros((1, out_features), jnp.float32)
    return (w1, b1, w2, b2)


if __name__ == "__main__":
    # Small, module-consistent shapes: N nodes with num_features, hidden dim, out_features.
    N, NUM_FEATURES, DIM, OUT_FEATURES = 16, 8, 32, 16
    DROPOUT = 0.2

    key = jax.random.PRNGKey(0)
    kx, kp, kd = jax.random.split(key, 3)

    x = jax.random.normal(kx, (N, NUM_FEATURES), dtype=jnp.float32)

    # Deterministic ring graph (bidirectional edges), plus `batch` vector (all zeros).
    src = jnp.arange(N, dtype=jnp.int32)
    dst = (src + 1) % N
    edge_index = jnp.concatenate(
        [jnp.stack([src, dst], axis=0), jnp.stack([dst, src], axis=0)], axis=1)
    batch = jnp.zeros((N,), dtype=jnp.int32)

    params = init_params(kp, NUM_FEATURES, DIM, OUT_FEATURES)

    out, out2 = encoder_feed_forward(batch, x, edge_index, params,
                                     dropout_p=DROPOUT, rng_key=kd, training=True)
    jax.block_until_ready(out)
    jax.block_until_ready(out2)
    assert out.shape == (N, OUT_FEATURES) and out.dtype == jnp.float32
    print("KERNEL_OK")
</pallas_src>

<mosaic_0001>
module attributes {stable_mosaic.version = 11 : i64} {
  func.func @_gcn_layer1_kernel(%arg0: i32, %arg1: i32, %arg2: memref<128x128xbf16, #tpu.memory_space<vmem>>, %arg3: memref<128x128xbf16, #tpu.memory_space<vmem>>, %arg4: memref<128x128xbf16, #tpu.memory_space<vmem>>, %arg5: memref<1x128xf32, #tpu.memory_space<vmem>>, %arg6: memref<128x128xbf16, #tpu.memory_space<vmem>>, %arg7: memref<128x128xf32, #tpu.memory_space<vmem>>, %arg8: memref<128x128xbf16, #tpu.memory_space<vmem>>, %arg9: memref<128x128xf32, #tpu.memory_space<vmem>>) attributes {dimension_semantics = [#tpu.dimension_semantics<parallel>, #tpu.dimension_semantics<arbitrary>], iteration_bounds = array<i64: 1, 1>, scalar_prefetch = 0 : i64, scratch_operands = 1 : i64, tpu.core_type = #tpu.core_type<tc>, window_params = [{transform_indices = @transform_0, window_bounds = array<i64: 128, 128>}, {transform_indices = @transform_1, window_bounds = array<i64: 128, 128>}, {pipeline_mode = #tpu.pipeline_mode<synchronous>, transform_indices = @transform_2, window_bounds = array<i64: 128, 128>}, {pipeline_mode = #tpu.pipeline_mode<synchronous>, transform_indices = @transform_3, window_bounds = array<i64: 1, 128>}, {pipeline_mode = #tpu.pipeline_mode<synchronous>, transform_indices = @transform_4, window_bounds = array<i64: 128, 128>}, {transform_indices = @transform_5, window_bounds = array<i64: 128, 128>}, {transform_indices = @transform_6, window_bounds = array<i64: 128, 128>}]} {
    %c0_i32 = arith.constant 0 : i32
    %0 = arith.cmpi eq, %arg1, %c0_i32 : i32
    %1 = arith.extui %0 : i1 to i32
    %c0_i32_0 = arith.constant 0 : i32
    %2 = arith.cmpi ne, %1, %c0_i32_0 : i32
    scf.if %2 {
      %cst_10 = arith.constant 0.000000e+00 : f32
      %12 = vector.broadcast %cst_10 : f32 to vector<128x128xf32>
      %c0_11 = arith.constant 0 : index
      %c0_12 = arith.constant 0 : index
      %13 = vector.load %arg9[%c0_11, %c0_12] : memref<128x128xf32, #tpu.memory_space<vmem>>, vector<128x128xf32>
      tpu.vector_store %arg9[%c0_11, %c0_12], %12 {strides = array<i32>} : memref<128x128xf32, #tpu.memory_space<vmem>>, vector<128x128xf32>,
    } else {
    }
    %c0 = arith.constant 0 : index
    %c0_1 = arith.constant 0 : index
    %3 = vector.load %arg9[%c0, %c0_1] : memref<128x128xf32, #tpu.memory_space<vmem>>, vector<128x128xf32>
    %c0_2 = arith.constant 0 : index
    %c0_3 = arith.constant 0 : index
    %4 = vector.load %arg2[%c0_2, %c0_3] : memref<128x128xbf16, #tpu.memory_space<vmem>>, vector<128x128xbf16>
    %c0_4 = arith.constant 0 : index
    %c0_5 = arith.constant 0 : index
    %5 = vector.load %arg3[%c0_4, %c0_5] : memref<128x128xbf16, #tpu.memory_space<vmem>>, vector<128x128xbf16>
    %cst = arith.constant dense<0.000000e+00> : vector<128x128xf32>
    %6 = tpu.matmul %4, %5, %cst {dimension_numbers = #tpu.dot_dimension_numbers<[1], [0], [0], [1], [0, 0, 1, 1], [], []>} : vector<128x128xbf16>, vector<128x128xbf16>, vector<128x128xf32> -> vector<128x128xf32>
    %7 = arith.addf %3, %6 : vector<128x128xf32>
    %c0_6 = arith.constant 0 : index
    %c0_7 = arith.constant 0 : index
    %8 = vector.load %arg9[%c0_6, %c0_7] : memref<128x128xf32, #tpu.memory_space<vmem>>, vector<128x128xf32>
    tpu.vector_store %arg9[%c0_6, %c0_7], %7 {strides = array<i32>} : memref<128x128xf32, #tpu.memory_space<vmem>>, vector<128x128xf32>,
    %c0_i32_8 = arith.constant 0 : i32
    %9 = arith.cmpi eq, %arg1, %c0_i32_8 : i32
    %10 = arith.extui %9 : i1 to i32
    %c0_i32_9 = arith.constant 0 : i32
    %11 = arith.cmpi ne, %10, %c0_i32_9 : i32
    scf.if %11 {
      %c0_10 = arith.constant 0 : index
      %c0_11 = arith.constant 0 : index
      %12 = vector.load %arg9[%c0_10, %c0_11] : memref<128x128xf32, #tpu.memory_space<vmem>>, vector<128x128xf32>
      %13 = arith.truncf %12 : vector<128x128xf32> to vector<128x128xbf16>
      %c0_12 = arith.constant 0 : index
      %c0_13 = arith.constant 0 : index
      %14 = vector.load %arg4[%c0_12, %c0_13] : memref<128x128xbf16, #tpu.memory_space<vmem>>, vector<128x128xbf16>
      %cst_14 = arith.constant dense<0.000000e+00> : vector<128x128xf32>
      %15 = tpu.matmul %13, %14, %cst_14 {dimension_numbers = #tpu.dot_dimension_numbers<[1], [0], [0], [1], [0, 0, 1, 1], [], []>} : vector<128x128xbf16>, vector<128x128xbf16>, vector<128x128xf32> -> vector<128x128xf32>
      %c0_15 = arith.constant 0 : index
      %c0_16 = arith.constant 0 : index
      %16 = vector.load %arg5[%c0_15, %c0_16] : memref<1x128xf32, #tpu.memory_space<vmem>>, vector<1x128xf32>
      %17 = vector.broadcast %16 : vector<1x128xf32> to vector<128x128xf32>
      %18 = arith.addf %15, %17 : vector<128x128xf32>
      %cst_17 = arith.constant 0.000000e+00 : f32
      %19 = vector.broadcast %cst_17 : f32 to vector<128x128xf32>
      %20 = arith.maximumf %18, %19 : vector<128x128xf32>
      %c0_18 = arith.constant 0 : index
      %c0_19 = arith.constant 0 : index
      %21 = vector.load %arg7[%c0_18, %c0_19] : memref<128x128xf32, #tpu.memory_space<vmem>>, vector<128x128xf32>
      %22 = arith.mulf %20, %21 : vector<128x128xf32>
      %23 = arith.truncf %22 : vector<128x128xf32> to vector<128x128xbf16>
      %c0_20 = arith.constant 0 : index
      %c0_21 = arith.constant 0 : index
      %24 = vector.load %arg6[%c0_20, %c0_21] : memref<128x128xbf16, #tpu.memory_space<vmem>>, vector<128x128xbf16>
      %cst_22 = arith.constant dense<0.000000e+00> : vector<128x128xf32>
      %25 = tpu.matmul %23, %24, %cst_22 {dimension_numbers = #tpu.dot_dimension_numbers<[1], [0], [0], [1], [0, 0, 1, 1], [], []>} : vector<128x128xbf16>, vector<128x128xbf16>, vector<128x128xf32> -> vector<128x128xf32>
      %26 = arith.truncf %25 : vector<128x128xf32> to vector<128x128xbf16>
      %c0_23 = arith.constant 0 : index
      %c0_24 = arith.constant 0 : index
      %27 = vector.load %arg8[%c0_23, %c0_24] : memref<128x128xbf16, #tpu.memory_space<vmem>>, vector<128x128xbf16>
      tpu.vector_store %arg8[%c0_23, %c0_24], %26 {strides = array<i32>} : memref<128x128xbf16, #tpu.memory_space<vmem>>, vector<128x128xbf16>,
    } else {
    }
    return
  }
  func.func @transform_0(%arg0: i32, %arg1: i32) -> (i32, i32) {
    %c0_i32 = arith.constant 0 : i32
    return %arg0, %arg1 : i32, i32
  }
  func.func @transform_1(%arg0: i32, %arg1: i32) -> (i32, i32) {
    %c0_i32 = arith.constant 0 : i32
    %c0_i32_0 = arith.constant 0 : i32
    return %arg1, %c0_i32 : i32, i32
  }
  func.func @transform_2(%arg0: i32, %arg1: i32) -> (i32, i32) {
    %c0_i32 = arith.constant 0 : i32
    %c0_i32_0 = arith.constant 0 : i32
    %c0_i32_1 = arith.constant 0 : i32
    return %c0_i32, %c0_i32_0 : i32, i32
  }
  func.func @transform_3(%arg0: i32, %arg1: i32) -> (i32, i32) {
    %c0_i32 = arith.constant 0 : i32
    %c0_i32_0 = arith.constant 0 : i32
    %c0_i32_1 = arith.constant 0 : i32
    return %c0_i32, %c0_i32_0 : i32, i32
  }
  func.func @transform_4(%arg0: i32, %arg1: i32) -> (i32, i32) {
    %c0_i32 = arith.constant 0 : i32
    %c0_i32_0 = arith.constant 0 : i32
    %c0_i32_1 = arith.constant 0 : i32
    return %c0_i32, %c0_i32_0 : i32, i32
  }
  func.func @transform_5(%arg0: i32, %arg1: i32) -> (i32, i32) {
    %c0_i32 = arith.constant 0 : i32
    %c0_i32_0 = arith.constant 0 : i32
    return %arg0, %c0_i32 : i32, i32
  }
  func.func @transform_6(%arg0: i32, %arg1: i32) -> (i32, i32) {
    %c0_i32 = arith.constant 0 : i32
    %c0_i32_0 = arith.constant 0 : i32
    return %arg0, %c0_i32 : i32, i32
  }
}

</mosaic_0001>

<llo_original>
// kernel: tpu_custom_call.1
$region0: #{tpu_custom_call.1}
  #allocation0 [shape = 'u32[]', space=smem, size = 0x4, offset = 0x4, fixed_abs, tag = 'smem constant byte address 0x4 - core index']
  #allocation1 [shape = 'u32[144,128]{1,0:T(1,128)}', space=vmem, size = 0x12000, scoped, tag = 'internal scratch']
  #allocation2 [shape = 'f32[128,128]{1,0:T(8,128)}', space=vmem, size = 0x10000, scoped, tag = 'scratch operand']
  %s0 = inlined_call_operand.hbm [shape: bf16[128,128], index: 0, kind: input, shape index: {}]
  %s1 = inlined_call_operand.hbm [shape: bf16[128,128], index: 1, kind: input, shape index: {}]
  %s2 = inlined_call_operand.hbm [shape: bf16[128,128], index: 2, kind: input, shape index: {}]
  %s3 = inlined_call_operand.vmem [shape: f32[1,128], index: 3, kind: input, shape index: {}]
  %s4 = inlined_call_operand.hbm [shape: bf16[128,128], index: 4, kind: input, shape index: {}]
  %s5 = inlined_call_operand.hbm [shape: f32[128,128], index: 5, kind: input, shape index: {}]
  %s6 = inlined_call_operand.hbm [shape: bf16[128,128], index: 6, kind: output, shape index: {}]
  %s7 = sld [smem:[#allocation0]]
  $region62: #{tpu_custom_call.1} parent=0
    _
  %s9 = ssub.s32 1, %s7
  %s10 = scalar_select 0, %s9, %s7
  $region1: #{tpu_custom_call.1} parent=0
    #allocation3 [shape = 'u8[32768]{0}', space=vmem, size = 0x8000, scoped, tag = 'input window, operand 0, single buffered']
    #allocation4 [shape = 's32[1]{0}', space=sflag, size = 0x4, scoped, tag = 'scoped memory for tpu_custom_call.1']
    #allocation5 [shape = 's32[1]{0}', space=sflag, size = 0x4, scoped, tag = 'scoped memory for tpu_custom_call.1']
    #allocation6 [shape = 'u8[32768]{0}', space=vmem, size = 0x8000, scoped, tag = 'input window, operand 1, single buffered']
    #allocation7 [shape = 's32[1]{0}', space=sflag, size = 0x4, scoped, tag = 'scoped memory for tpu_custom_call.1']
    #allocation8 [shape = 'u8[32768]{0}', space=vmem, size = 0x8000, scoped, tag = 'input window, operand 2, single buffered']
    #allocation9 [shape = 'u8[32768]{0}', space=vmem, size = 0x8000, scoped, tag = 'input window, operand 4, single buffered']
    #allocation10 [shape = 's32[1]{0}', space=sflag, size = 0x4, scoped, tag = 'scoped memory for tpu_custom_call.1']
    #allocation11 [shape = 'u8[65536]{0}', space=vmem, size = 0x10000, scoped, tag = 'input window, operand 5, single buffered']
    #allocation12 [shape = 'u8[32768]{0}', space=vmem, size = 0x8000, scoped, tag = 'output window, operand 0, single buffered']
    %11 = vsyncpa [#allocation4], 0
    %12 = vsyncpa [#allocation7], 0
    %13 = vsyncpa [#allocation10], 0
    %14 = vsyncpa [#allocation5], 0
    // Predicated region
    $region2: #{tpu_custom_call.1} parent=1 // pred_check
      _
    $region3: #{tpu_custom_call.1} parent=1 // pred_check_branch
      %16 = sbr.rel (0) target = $region5
    $region4: #{tpu_custom_call.1} parent=1 // pred_region
      %s18 = ssub.s32 1024, 1024
      %19 = vsyncadd [#allocation4], %s18
      %s20 = sshll.u32 [#allocation3], 4
      %s21 = int_to_ptr.vmem [resolvable:$true] %s20
      %26 = dma.hbm_to_vmem [thread:$0]  %s0, 1024, %s21, [#allocation4], 64, 64, 4
    $region5: #{tpu_custom_call.1} parent=1 // pred_fallthru
      _
    // Predicated region
    $region6: #{tpu_custom_call.1} parent=1 // pred_check
      _
    $region7: #{tpu_custom_call.1} parent=1 // pred_check_branch
      %28 = sbr.rel (0) target = $region9
    $region8: #{tpu_custom_call.1} parent=1 // pred_region
      %s30 = ssub.s32 1024, 1024
      %31 = vsyncadd [#allocation7], %s30
      %s32 = sshll.u32 [#allocation6], 4
      %s33 = int_to_ptr.vmem [resolvable:$true] %s32
      %38 = dma.hbm_to_vmem [thread:$0]  %s1, 1024, %s33, [#allocation7], 64, 64, 4
    $region9: #{tpu_custom_call.1} parent=1 // pred_fallthru
      _
    // Predicated region
    $region10: #{tpu_custom_call.1} parent=1 // pred_check
      _
    $region11: #{tpu_custom_call.1} parent=1 // pred_check_branch
      %40 = sbr.rel (0) target = $region13
    $region12: #{tpu_custom_call.1} parent=1 // pred_region
      %s42 = ssub.s32 1024, 1024
      %43 = vsyncadd [#allocation7], %s42
      %s44 = sshll.u32 [#allocation8], 4
      %s45 = int_to_ptr.vmem [resolvable:$true] %s44
      %50 = dma.hbm_to_vmem [thread:$0]  %s2, 1024, %s45, [#allocation7], 64, 64, 4
    $region13: #{tpu_custom_call.1} parent=1 // pred_fallthru
      _
    // Predicated region
    $region14: #{tpu_custom_call.1} parent=1 // pred_check
      _
    $region15: #{tpu_custom_call.1} parent=1 // pred_check_branch
      %52 = sbr.rel (0) target = $region17
    $region16: #{tpu_custom_call.1} parent=1 // pred_region
      _
    $region17: #{tpu_custom_call.1} parent=1 // pred_fallthru
      _
    // Predicated region
    $region18: #{tpu_custom_call.1} parent=1 // pred_check
      _
    $region19: #{tpu_custom_call.1} parent=1 // pred_check_branch
      %54 = sbr.rel (0) target = $region21
    $region20: #{tpu_custom_call.1} parent=1 // pred_region
      %s56 = ssub.s32 1024, 1024
      %57 = vsyncadd [#allocation10], %s56
      %s58 = sshll.u32 [#allocation9], 4
      %s59 = int_to_ptr.vmem [resolvable:$true] %s58
      %64 = dma.hbm_to_vmem [thread:$0]  %s4, 1024, %s59, [#allocation10], 64, 64, 4
    $region21: #{tpu_custom_call.1} parent=1 // pred_fallthru
      _
    // Predicated region
    $region22: #{tpu_custom_call.1} parent=1 // pred_check
      _
    $region23: #{tpu_custom_call.1} parent=1 // pred_check_branch
      %66 = sbr.rel (0) target = $region25
    $region24: #{tpu_custom_call.1} parent=1 // pred_region
      %s68 = ssub.s32 2048, 2048
      %69 = vsyncadd [#allocation10], %s68
      %s70 = sshll.u32 [#allocation11], 4
      %s71 = int_to_ptr.vmem [resolvable:$true] %s70
      %76 = dma.hbm_to_vmem [thread:$0]  %s5, 2048, %s71, [#allocation10], 128, 128, 8
    $region25: #{tpu_custom_call.1} parent=1 // pred_fallthru
      _
    // Predicated region
    $region26: #{tpu_custom_call.1} parent=1 // pred_check
      _
    $region27: #{tpu_custom_call.1} parent=1 // pred_check_branch
      %78 = sbr.rel (0) target = $region29
    $region28: #{tpu_custom_call.1} parent=1 // pred_region
      %79 = dma.done [#allocation4], 1024
    $region29: #{tpu_custom_call.1} parent=1 // pred_fallthru
      _
    // Predicated region
    $region30: #{tpu_custom_call.1} parent=1 // pred_check
      _
    $region31: #{tpu_custom_call.1} parent=1 // pred_check_branch
      %81 = sbr.rel (0) target = $region33
    $region32: #{tpu_custom_call.1} parent=1 // pred_region
      %82 = dma.done [#allocation7], 1024
    $region33: #{tpu_custom_call.1} parent=1 // pred_fallthru
      _
    // Predicated region
    $region34: #{tpu_custom_call.1} parent=1 // pred_check
      _
    $region35: #{tpu_custom_call.1} parent=1 // pred_check_branch
      %84 = sbr.rel (0) target = $region37
    $region36: #{tpu_custom_call.1} parent=1 // pred_region
      %85 = dma.done [#allocation7], 1024
    $region37: #{tpu_custom_call.1} parent=1 // pred_fallthru
      _
    // Predicated region
    $region38: #{tpu_custom_call.1} parent=1 // pred_check
      _
    $region39: #{tpu_custom_call.1} parent=1 // pred_check_branch
      %87 = sbr.rel (0) target = $region41
    $region40: #{tpu_custom_call.1} parent=1 // pred_region
      %88 = dma.done [#allocation10], 1024
    $region41: #{tpu_custom_call.1} parent=1 // pred_fallthru
      _
    // Predicated region
    $region42: #{tpu_custom_call.1} parent=1 // pred_check
      _
    $region43: #{tpu_custom_call.1} parent=1 // pred_check_branch
      %90 = sbr.rel (0) target = $region45
    $region44: #{tpu_custom_call.1} parent=1 // pred_region
      %91 = dma.done [#allocation10], 2048
    $region45: #{tpu_custom_call.1} parent=1 // pred_fallthru
      _
    %p93 = scmp.eq.s32.totalorder 0, 0
    // Predicated region
    $region46: #{tpu_custom_call.1} parent=1 // pred_check
      %p94 = pneg %p93
    $region47: #{tpu_custom_call.1} parent=1 // pred_check_branch
      %96 = sbr.rel (%p94) target = $region49
    $region48: #{tpu_custom_call.1} parent=1 // pred_region
      %97 = vst [vmem:[#allocation2] sm:$0xff] 0.0
      %98 = vst [vmem:[#allocation2 + $0x8] sm:$0xff] 0.0
      %99 = vst [vmem:[#allocation2 + $0x10] sm:$0xff] 0.0
      %100 = vst [vmem:[#allocation2 + $0x18] sm:$0xff] 0.0
      %101 = vst [vmem:[#allocation2 + $0x20] sm:$0xff] 0.0
      %102 = vst [vmem:[#allocation2 + $0x28] sm:$0xff] 0.0
      %103 = vst [vmem:[#allocation2 + $0x30] sm:$0xff] 0.0
      %104 = vst [vmem:[#allocation2 + $0x38] sm:$0xff] 0.0
      %105 = vst [vmem:[#allocation2 + $0x40] sm:$0xff] 0.0
      %106 = vst [vmem:[#allocation2 + $0x48] sm:$0xff] 0.0
      %107 = vst [vmem:[#allocation2 + $0x50] sm:$0xff] 0.0
      %108 = vst [vmem:[#allocation2 + $0x58] sm:$0xff] 0.0
      %109 = vst [vmem:[#allocation2 + $0x60] sm:$0xff] 0.0
      %110 = vst [vmem:[#allocation2 + $0x68] sm:$0xff] 0.0
      %111 = vst [vmem:[#allocation2 + $0x70] sm:$0xff] 0.0
      %112 = vst [vmem:[#allocation2 + $0x78] sm:$0xff] 0.0
    $region49: #{tpu_custom_call.1} parent=1 // pred_fallthru
      _
    %v113 = vld [vmem:[#allocation2] sm:$0xff]
    %v114 = vld [vmem:[#allocation2 + $0x8] sm:$0xff]
    %v115 = vld [vmem:[#allocation2 + $0x10] sm:$0xff]
    %v116 = vld [vmem:[#allocation2 + $0x18] sm:$0xff]
    %v117 = vld [vmem:[#allocation2 + $0x20] sm:$0xff]
    %v118 = vld [vmem:[#allocation2 + $0x28] sm:$0xff]
    %v119 = vld [vmem:[#allocation2 + $0x30] sm:$0xff]
    %v120 = vld [vmem:[#allocation2 + $0x38] sm:$0xff]
    %v121 = vld [vmem:[#allocation2 + $0x40] sm:$0xff]
    %v122 = vld [vmem:[#allocation2 + $0x48] sm:$0xff]
    %v123 = vld [vmem:[#allocation2 + $0x50] sm:$0xff]
    %v124 = vld [vmem:[#allocation2 + $0x58] sm:$0xff]
    %v125 = vld [vmem:[#allocation2 + $0x60] sm:$0xff]
    %v126 = vld [vmem:[#allocation2 + $0x68] sm:$0xff]
    %v127 = vld [vmem:[#allocation2 + $0x70] sm:$0xff]
    %v128 = vld [vmem:[#allocation2 + $0x78] sm:$0xff]
    %v129 = vld [vmem:[#allocation3] sm:$0xf]
    %v130 = vld [vmem:[#allocation3 + $0x4] sm:$0xf]
    %v131 = vld [vmem:[#allocation3 + $0x8] sm:$0xf]
    %v132 = vld [vmem:[#allocation3 + $0xc] sm:$0xf]
    %v133 = vld [vmem:[#allocation3 + $0x10] sm:$0xf]
    %v134 = vld [vmem:[#allocation3 + $0x14] sm:$0xf]
    %v135 = vld [vmem:[#allocation3 + $0x18] sm:$0xf]
    %v136 = vld [vmem:[#allocation3 + $0x1c] sm:$0xf]
    %v137 = vld [vmem:[#allocation3 + $0x20] sm:$0xf]
    %v138 = vld [vmem:[#allocation3 + $0x24] sm:$0xf]
    %v139 = vld [vmem:[#allocation3 + $0x28] sm:$0xf]
    %v140 = vld [vmem:[#allocation3 + $0x2c] sm:$0xf]
    %v141 = vld [vmem:[#allocation3 + $0x30] sm:$0xf]
    %v142 = vld [vmem:[#allocation3 + $0x34] sm:$0xf]
    %v143 = vld [vmem:[#allocation3 + $0x38] sm:$0xf]
    %v144 = vld [vmem:[#allocation3 + $0x3c] sm:$0xf]
    %v145 = vld [vmem:[#allocation6] sm:$0xf]
    %v146 = vld [vmem:[#allocation6 + $0x4] sm:$0xf]
    %v147 = vld [vmem:[#allocation6 + $0x8] sm:$0xf]
    %v148 = vld [vmem:[#allocation6 + $0xc] sm:$0xf]
    %v149 = vld [vmem:[#allocation6 + $0x10] sm:$0xf]
    %v150 = vld [vmem:[#allocation6 + $0x14] sm:$0xf]
    %v151 = vld [vmem:[#allocation6 + $0x18] sm:$0xf]
    %v152 = vld [vmem:[#allocation6 + $0x1c] sm:$0xf]
    %v153 = vld [vmem:[#allocation6 + $0x20] sm:$0xf]
    %v154 = vld [vmem:[#allocation6 + $0x24] sm:$0xf]
    %v155 = vld [vmem:[#allocation6 + $0x28] sm:$0xf]
    %v156 = vld [vmem:[#allocation6 + $0x2c] sm:$0xf]
    %v157 = vld [vmem:[#allocation6 + $0x30] sm:$0xf]
    %v158 = vld [vmem:[#allocation6 + $0x34] sm:$0xf]
    %v159 = vld [vmem:[#allocation6 + $0x38] sm:$0xf]
    %v160 = vld [vmem:[#allocation6 + $0x3c] sm:$0xf]
    %v177 = vunpack.c.l.b16 %v129
    %v178 = vunpack.c.l.b16 %v130
    %v179 = vunpack.c.l.b16 %v131
    %v180 = vunpack.c.l.b16 %v132
    %v181 = vunpack.c.l.b16 %v133
    %v182 = vunpack.c.l.b16 %v134
    %v183 = vunpack.c.l.b16 %v135
    %v184 = vunpack.c.l.b16 %v136
    %v185 = vunpack.c.l.b16 %v137
    %v186 = vunpack.c.l.b16 %v138
    %v187 = vunpack.c.l.b16 %v139
    %v188 = vunpack.c.l.b16 %v140
    %v189 = vunpack.c.l.b16 %v141
    %v190 = vunpack.c.l.b16 %v142
    %v191 = vunpack.c.l.b16 %v143
    %v192 = vunpack.c.l.b16 %v144
    %v193 = vpack.c.b16 %v178, %v177
    %v194 = vpack.c.b16 %v180, %v179
    %v195 = vpack.c.b16 %v182, %v181
    %v196 = vpack.c.b16 %v184, %v183
    %v197 = vpack.c.b16 %v186, %v185
    %v198 = vpack.c.b16 %v188, %v187
    %v199 = vpack.c.b16 %v190, %v189
    %v200 = vpack.c.b16 %v192, %v191
    %v225 = vunpack.c.l.b16 %v145
    %v226 = vunpack.c.l.b16 %v146
    %v227 = vunpack.c.l.b16 %v147
    %v228 = vunpack.c.l.b16 %v148
    %v229 = vunpack.c.l.b16 %v149
    %v230 = vunpack.c.l.b16 %v150
    %v231 = vunpack.c.l.b16 %v151
    %v232 = vunpack.c.l.b16 %v152
    %v233 = vunpack.c.l.b16 %v153
    %v234 = vunpack.c.l.b16 %v154
    %v235 = vunpack.c.l.b16 %v155
    %v236 = vunpack.c.l.b16 %v156
    %v237 = vunpack.c.l.b16 %v157
    %v238 = vunpack.c.l.b16 %v158
    %v239 = vunpack.c.l.b16 %v159
    %v240 = vunpack.c.l.b16 %v160
    %v241 = vpack.c.b16 %v226, %v225
    %v242 = vpack.c.b16 %v228, %v227
    %v243 = vpack.c.b16 %v230, %v229
    %v244 = vpack.c.b16 %v232, %v231
    %v245 = vpack.c.b16 %v234, %v233
    %v246 = vpack.c.b16 %v236, %v235
    %v247 = vpack.c.b16 %v238, %v237
    %v248 = vpack.c.b16 %v240, %v239
    %257 = vmatprep.subr.bf16.mxu0 0
    %258 = vmatpush1.bf16.msra.mxu0 %v241
    %259 = vmatprep.subr.bf16.mxu0 0
    %260 = vmatpush1.bf16.msra.mxu0 %v242
    %261 = vmatprep.subr.bf16.mxu0 0
    %262 = vmatpush1.bf16.msra.mxu0 %v243
    %263 = vmatprep.subr.bf16.mxu0 0
    %264 = vmatpush1.bf16.msra.mxu0 %v244
    %265 = vmatprep.subr.bf16.mxu0 0
    %266 = vmatpush1.bf16.msra.mxu0 %v245
    %267 = vmatprep.subr.bf16.mxu0 0
    %268 = vmatpush1.bf16.msra.mxu0 %v246
    %269 = vmatprep.subr.bf16.mxu0 0
    %270 = vmatpush1.bf16.msra.mxu0 %v247
    %271 = vmatprep.subr.bf16.mxu0 0
    %272 = vmatpush1.bf16.msra.mxu0 %v248
    %273 = vmatprep.subr.bf16.mxu0 0
    %274 = vmatpush1.bf16.msra.mxu0 0
    %275 = vmatprep.subr.bf16.mxu0 0
    %276 = vmatpush1.bf16.msra.mxu0 0
    %277 = vmatprep.subr.bf16.mxu0 0
    %278 = vmatpush1.bf16.msra.mxu0 0
    %279 = vmatprep.subr.bf16.mxu0 0
    %280 = vmatpush1.bf16.msra.mxu0 0
    %281 = vmatprep.subr.bf16.mxu0 0
    %282 = vmatpush1.bf16.msra.mxu0 0
    %283 = vmatprep.subr.bf16.mxu0 0
    %284 = vmatpush1.bf16.msra.mxu0 0
    %285 = vmatprep.subr.bf16.mxu0 0
    %286 = vmatpush1.bf16.msra.mxu0 0
    %287 = vmatprep.subr.bf16.mxu0 0
    %288 = vmatpush1.bf16.msra.mxu0 0
    %289 = vmatprep.mubr.bf16.mxu0 0
    %290 = vmatmul.mubr.bf16.gmra.mrb[0].mxu0 %v193
    %v291 = vpop.f32.mrb[0].mxu0
    %v292 = vadd.f32 0.0, %v291
    %v293 = vpop.f32.mrb[0].mxu0
    %v294 = vpop.f32.mrb[0].mxu0
    %v295 = vadd.f32 0.0, %v294
    %v296 = vpop.f32.mrb[0].mxu0
    %297 = vmatprep.mubr.bf16.mxu0 0
    %298 = vmatmul.mubr.bf16.gmra.mrb[0].mxu0 %v194
    %v299 = vpop.f32.mrb[0].mxu0
    %v300 = vadd.f32 0.0, %v299
    %v301 = vpop.f32.mrb[0].mxu0
    %v302 = vpop.f32.mrb[0].mxu0
    %v303 = vadd.f32 0.0, %v302
    %v304 = vpop.f32.mrb[0].mxu0
    %305 = vmatprep.mubr.bf16.mxu0 0
    %306 = vmatmul.mubr.bf16.gmra.mrb[0].mxu0 %v195
    %v307 = vpop.f32.mrb[0].mxu0
    %v308 = vadd.f32 0.0, %v307
    %v309 = vpop.f32.mrb[0].mxu0
    %v310 = vpop.f32.mrb[0].mxu0
    %v311 = vadd.f32 0.0, %v310
    %v312 = vpop.f32.mrb[0].mxu0
    %313 = vmatprep.mubr.bf16.mxu0 0
    %314 = vmatmul.mubr.bf16.gmra.mrb[0].mxu0 %v196
    %v315 = vpop.f32.mrb[0].mxu0
    %v316 = vadd.f32 0.0, %v315
    %v317 = vpop.f32.mrb[0].mxu0
    %v318 = vpop.f32.mrb[0].mxu0
    %v319 = vadd.f32 0.0, %v318
    %v320 = vpop.f32.mrb[0].mxu0
    %321 = vmatprep.mubr.bf16.mxu0 0
    %322 = vmatmul.mubr.bf16.gmra.mrb[0].mxu0 %v197
    %v323 = vpop.f32.mrb[0].mxu0
    %v324 = vadd.f32 0.0, %v323
    %v325 = vpop.f32.mrb[0].mxu0
    %v326 = vpop.f32.mrb[0].mxu0
    %v327 = vadd.f32 0.0, %v326
    %v328 = vpop.f32.mrb[0].mxu0
    %329 = vmatprep.mubr.bf16.mxu0 0
    %330 = vmatmul.mubr.bf16.gmra.mrb[0].mxu0 %v198
    %v331 = vpop.f32.mrb[0].mxu0
    %v332 = vadd.f32 0.0, %v331
    %v333 = vpop.f32.mrb[0].mxu0
    %v334 = vpop.f32.mrb[0].mxu0
    %v335 = vadd.f32 0.0, %v334
    %v336 = vpop.f32.mrb[0].mxu0
    %337 = vmatprep.mubr.bf16.mxu0 0
    %338 = vmatmul.mubr.bf16.gmra.mrb[0].mxu0 %v199
    %v339 = vpop.f32.mrb[0].mxu0
    %v340 = vadd.f32 0.0, %v339
    %v341 = vpop.f32.mrb[0].mxu0
    %v342 = vpop.f32.mrb[0].mxu0
    %v343 = vadd.f32 0.0, %v342
    %v344 = vpop.f32.mrb[0].mxu0
    %345 = vmatprep.mubr.bf16.mxu0 0
    %346 = vmatmul.mubr.bf16.gmra.mrb[0].mxu0 %v200
    %v347 = vpop.f32.mrb[0].mxu0
    %v348 = vadd.f32 0.0, %v347
    %v349 = vpop.f32.mrb[0].mxu0
    %v350 = vpop.f32.mrb[0].mxu0
    %v351 = vadd.f32 0.0, %v350
    %v352 = vpop.f32.mrb[0].mxu0
    %353 = vdwg.mxu0
    %v354 = vadd.f32 %v113, %v292
    %v355 = vadd.f32 %v114, %v295
    %v356 = vadd.f32 %v115, %v300
    %v357 = vadd.f32 %v116, %v303
    %v358 = vadd.f32 %v117, %v308
    %v359 = vadd.f32 %v118, %v311
    %v360 = vadd.f32 %v119, %v316
    %v361 = vadd.f32 %v120, %v319
    %v362 = vadd.f32 %v121, %v324
    %v363 = vadd.f32 %v122, %v327
    %v364 = vadd.f32 %v123, %v332
    %v365 = vadd.f32 %v124, %v335
    %v366 = vadd.f32 %v125, %v340
    %v367 = vadd.f32 %v126, %v343
    %v368 = vadd.f32 %v127, %v348
    %v369 = vadd.f32 %v128, %v351
    %370 = vst [vmem:[#allocation2] sm:$0xff] %v354
    %371 = vst [vmem:[#allocation2 + $0x8] sm:$0xff] %v355
    %372 = vst [vmem:[#allocation2 + $0x10] sm:$0xff] %v356
    %373 = vst [vmem:[#allocation2 + $0x18] sm:$0xff] %v357
    %374 = vst [vmem:[#allocation2 + $0x20] sm:$0xff] %v358
    %375 = vst [vmem:[#allocation2 + $0x28] sm:$0xff] %v359
    %376 = vst [vmem:[#allocation2 + $0x30] sm:$0xff] %v360
    %377 = vst [vmem:[#allocation2 + $0x38] sm:$0xff] %v361
    %378 = vst [vmem:[#allocation2 + $0x40] sm:$0xff] %v362
    %379 = vst [vmem:[#allocation2 + $0x48] sm:$0xff] %v363
    %380 = vst [vmem:[#allocation2 + $0x50] sm:$0xff] %v364
    %381 = vst [vmem:[#allocation2 + $0x58] sm:$0xff] %v365
    %382 = vst [vmem:[#allocation2 + $0x60] sm:$0xff] %v366
    %383 = vst [vmem:[#allocation2 + $0x68] sm:$0xff] %v367
    %384 = vst [vmem:[#allocation2 + $0x70] sm:$0xff] %v368
    %385 = vst [vmem:[#allocation2 + $0x78] sm:$0xff] %v369
    // Predicated region
    $region50: #{tpu_custom_call.1} parent=1 // pred_check
      %p386 = pneg %p93
    $region51: #{tpu_custom_call.1} parent=1 // pred_check_branch
      %388 = sbr.rel (%p386) target = $region53
    $region52: #{tpu_custom_call.1} parent=1 // pred_region
      %v389 = vld [vmem:[#allocation2] sm:$0xff]
      %v390 = vld [vmem:[#allocation2 + $0x8] sm:$0xff]
      %v391 = vld [vmem:[#allocation2 + $0x10] sm:$0xff]
      %v392 = vld [vmem:[#allocation2 + $0x18] sm:$0xff]
      %v393 = vld [vmem:[#allocation2 + $0x20] sm:$0xff]
      %v394 = vld [vmem:[#allocation2 + $0x28] sm:$0xff]
      %v395 = vld [vmem:[#allocation2 + $0x30] sm:$0xff]
      %v396 = vld [vmem:[#allocation2 + $0x38] sm:$0xff]
      %v397 = vld [vmem:[#allocation2 + $0x40] sm:$0xff]
      %v398 = vld [vmem:[#allocation2 + $0x48] sm:$0xff]
      %v399 = vld [vmem:[#allocation2 + $0x50] sm:$0xff]
      %v400 = vld [vmem:[#allocation2 + $0x58] sm:$0xff]
      %v401 = vld [vmem:[#allocation2 + $0x60] sm:$0xff]
      %v402 = vld [vmem:[#allocation2 + $0x68] sm:$0xff]
      %v403 = vld [vmem:[#allocation2 + $0x70] sm:$0xff]
      %v404 = vld [vmem:[#allocation2 + $0x78] sm:$0xff]
      %v405 = vpack.c.bf16 %v390, %v389
      %v406 = vpack.c.bf16 %v392, %v391
      %v407 = vpack.c.bf16 %v394, %v393
      %v408 = vpack.c.bf16 %v396, %v395
      %v409 = vpack.c.bf16 %v398, %v397
      %v410 = vpack.c.bf16 %v400, %v399
      %v411 = vpack.c.bf16 %v402, %v401
      %v412 = vpack.c.bf16 %v404, %v403
      %v413 = vld [vmem:[#allocation8] sm:$0xf]
      %v414 = vld [vmem:[#allocation8 + $0x4] sm:$0xf]
      %v415 = vld [vmem:[#allocation8 + $0x8] sm:$0xf]
      %v416 = vld [vmem:[#allocation8 + $0xc] sm:$0xf]
      %v417 = vld [vmem:[#allocation8 + $0x10] sm:$0xf]
      %v418 = vld [vmem:[#allocation8 + $0x14] sm:$0xf]
      %v419 = vld [vmem:[#allocation8 + $0x18] sm:$0xf]
      %v420 = vld [vmem:[#allocation8 + $0x1c] sm:$0xf]
      %v421 = vld [vmem:[#allocation8 + $0x20] sm:$0xf]
      %v422 = vld [vmem:[#allocation8 + $0x24] sm:$0xf]
      %v423 = vld [vmem:[#allocation8 + $0x28] sm:$0xf]
      %v424 = vld [vmem:[#allocation8 + $0x2c] sm:$0xf]
      %v425 = vld [vmem:[#allocation8 + $0x30] sm:$0xf]
      %v426 = vld [vmem:[#allocation8 + $0x34] sm:$0xf]
      %v427 = vld [vmem:[#allocation8 + $0x38] sm:$0xf]
      %v428 = vld [vmem:[#allocation8 + $0x3c] sm:$0xf]
      %v429 = vld [vmem:[%s3] sm:$0x1]
      %v431 = vlaneseq
      %v432 = vshrl.u32 %v431, 7
      %v433 = vsub.s32 0, %v432
      %v434 = vrot.slane %v429, %v433
      %v452 = vunpack.c.l.b16 %v413
      %v453 = vunpack.c.l.b16 %v414
      %v454 = vunpack.c.l.b16 %v415
      %v455 = vunpack.c.l.b16 %v416
      %v456 = vunpack.c.l.b16 %v417
      %v457 = vunpack.c.l.b16 %v418
      %v458 = vunpack.c.l.b16 %v419
      %v459 = vunpack.c.l.b16 %v420
      %v460 = vunpack.c.l.b16 %v421
      %v461 = vunpack.c.l.b16 %v422
      %v462 = vunpack.c.l.b16 %v423
      %v463 = vunpack.c.l.b16 %v424
      %v464 = vunpack.c.l.b16 %v425
      %v465 = vunpack.c.l.b16 %v426
      %v466 = vunpack.c.l.b16 %v427
      %v467 = vunpack.c.l.b16 %v428
      %v468 = vpack.c.b16 %v453, %v452
      %v469 = vpack.c.b16 %v455, %v454
      %v470 = vpack.c.b16 %v457, %v456
      %v471 = vpack.c.b16 %v459, %v458
      %v472 = vpack.c.b16 %v461, %v460
      %v473 = vpack.c.b16 %v463, %v462
      %v474 = vpack.c.b16 %v465, %v464
      %v475 = vpack.c.b16 %v467, %v466
      %484 = vmatprep.subr.bf16.mxu0 0
      %485 = vmatpush1.bf16.msra.mxu0 %v468
      %486 = vmatprep.subr.bf16.mxu0 0
      %487 = vmatpush1.bf16.msra.mxu0 %v469
      %488 = vmatprep.subr.bf16.mxu0 0
      %489 = vmatpush1.bf16.msra.mxu0 %v470
      %490 = vmatprep.subr.bf16.mxu0 0
      %491 = vmatpush1.bf16.msra.mxu0 %v471
      %492 = vmatprep.subr.bf16.mxu0 0
      %493 = vmatpush1.bf16.msra.mxu0 %v472
      %494 = vmatprep.subr.bf16.mxu0 0
      %495 = vmatpush1.bf16.msra.mxu0 %v473
      %496 = vmatprep.subr.bf16.mxu0 0
      %497 = vmatpush1.bf16.msra.mxu0 %v474
      %498 = vmatprep.subr.bf16.mxu0 0
      %499 = vmatpush1.bf16.msra.mxu0 %v475
      %500 = vmatprep.subr.bf16.mxu0 0
      %501 = vmatpush1.bf16.msra.mxu0 0
      %502 = vmatprep.subr.bf16.mxu0 0
      %503 = vmatpush1.bf16.msra.mxu0 0
      %504 = vmatprep.subr.bf16.mxu0 0
      %505 = vmatpush1.bf16.msra.mxu0 0
      %506 = vmatprep.subr.bf16.mxu0 0
      %507 = vmatpush1.bf16.msra.mxu0 0
      %508 = vmatprep.subr.bf16.mxu0 0
      %509 = vmatpush1.bf16.msra.mxu0 0
      %510 = vmatprep.subr.bf16.mxu0 0
      %511 = vmatpush1.bf16.msra.mxu0 0
      %512 = vmatprep.subr.bf16.mxu0 0
      %513 = vmatpush1.bf16.msra.mxu0 0
      %514 = vmatprep.subr.bf16.mxu0 0
      %515 = vmatpush1.bf16.msra.mxu0 0
      %516 = vmatprep.mubr.bf16.mxu0 0
      %517 = vmatmul.mubr.bf16.gmra.mrb[0].mxu0 %v405
      %v518 = vpop.f32.mrb[0].mxu0
      %v519 = vadd.f32 %v434, %v518
      %v520 = vpop.f32.mrb[0].mxu0
      %v521 = vpop.f32.mrb[0].mxu0
      %v522 = vadd.f32 %v434, %v521
      %v523 = vpop.f32.mrb[0].mxu0
      %524 = vmatprep.mubr.bf16.mxu0 0
      %525 = vmatmul.mubr.bf16.gmra.mrb[0].mxu0 %v406
      %v526 = vpop.f32.mrb[0].mxu0
      %v527 = vadd.f32 %v434, %v526
      %v528 = vpop.f32.mrb[0].mxu0
      %v529 = vpop.f32.mrb[0].mxu0
      %v530 = vadd.f32 %v434, %v529
      %v531 = vpop.f32.mrb[0].mxu0
      %532 = vmatprep.mubr.bf16.mxu0 0
      %533 = vmatmul.mubr.bf16.gmra.mrb[0].mxu0 %v407
      %v534 = vpop.f32.mrb[0].mxu0
      %v535 = vadd.f32 %v434, %v534
      %v536 = vpop.f32.mrb[0].mxu0
      %v537 = vpop.f32.mrb[0].mxu0
      %v538 = vadd.f32 %v434, %v537
      %v539 = vpop.f32.mrb[0].mxu0
      %540 = vmatprep.mubr.bf16.mxu0 0
      %541 = vmatmul.mubr.bf16.gmra.mrb[0].mxu0 %v408
      %v542 = vpop.f32.mrb[0].mxu0
      %v543 = vadd.f32 %v434, %v542
      %v544 = vpop.f32.mrb[0].mxu0
      %v545 = vpop.f32.mrb[0].mxu0
      %v546 = vadd.f32 %v434, %v545
      %v547 = vpop.f32.mrb[0].mxu0
      %548 = vmatprep.mubr.bf16.mxu0 0
      %549 = vmatmul.mubr.bf16.gmra.mrb[0].mxu0 %v409
      %v550 = vpop.f32.mrb[0].mxu0
      %v551 = vadd.f32 %v434, %v550
      %v552 = vpop.f32.mrb[0].mxu0
      %v553 = vpop.f32.mrb[0].mxu0
      %v554 = vadd.f32 %v434, %v553
      %v555 = vpop.f32.mrb[0].mxu0
      %556 = vmatprep.mubr.bf16.mxu0 0
      %557 = vmatmul.mubr.bf16.gmra.mrb[0].mxu0 %v410
      %v558 = vpop.f32.mrb[0].mxu0
      %v559 = vadd.f32 %v434, %v558
      %v560 = vpop.f32.mrb[0].mxu0
      %v561 = vpop.f32.mrb[0].mxu0
      %v562 = vadd.f32 %v434, %v561
      %v563 = vpop.f32.mrb[0].mxu0
      %564 = vmatprep.mubr.bf16.mxu0 0
      %565 = vmatmul.mubr.bf16.gmra.mrb[0].mxu0 %v411
      %v566 = vpop.f32.mrb[0].mxu0
      %v567 = vadd.f32 %v434, %v566
      %v568 = vpop.f32.mrb[0].mxu0
      %v569 = vpop.f32.mrb[0].mxu0
      %v570 = vadd.f32 %v434, %v569
      %v571 = vpop.f32.mrb[0].mxu0
      %572 = vmatprep.mubr.bf16.mxu0 0
      %573 = vmatmul.mubr.bf16.gmra.mrb[0].mxu0 %v412
      %v574 = vpop.f32.mrb[0].mxu0
      %v575 = vadd.f32 %v434, %v574
      %v576 = vpop.f32.mrb[0].mxu0
      %v577 = vpop.f32.mrb[0].mxu0
      %v578 = vadd.f32 %v434, %v577
      %v579 = vpop.f32.mrb[0].mxu0
      %580 = vdwg.mxu0
      %v581 = vmax.f32 %v519, 0.0
      %v582 = vmax.f32 %v522, 0.0
      %v583 = vmax.f32 %v527, 0.0
      %v584 = vmax.f32 %v530, 0.0
      %v585 = vmax.f32 %v535, 0.0
      %v586 = vmax.f32 %v538, 0.0
      %v587 = vmax.f32 %v543, 0.0
      %v588 = vmax.f32 %v546, 0.0
      %v589 = vmax.f32 %v551, 0.0
      %v590 = vmax.f32 %v554, 0.0
      %v591 = vmax.f32 %v559, 0.0
      %v592 = vmax.f32 %v562, 0.0
      %v593 = vmax.f32 %v567, 0.0
      %v594 = vmax.f32 %v570, 0.0
      %v595 = vmax.f32 %v575, 0.0
      %v596 = vmax.f32 %v578, 0.0
      %v597 = vld [vmem:[#allocation11] sm:$0xff]
      %v598 = vld [vmem:[#allocation11 + $0x8] sm:$0xff]
      %v599 = vld [vmem:[#allocation11 + $0x10] sm:$0xff]
      %v600 = vld [vmem:[#allocation11 + $0x18] sm:$0xff]
      %v601 = vld [vmem:[#allocation11 + $0x20] sm:$0xff]
      %v602 = vld [vmem:[#allocation11 + $0x28] sm:$0xff]
      %v603 = vld [vmem:[#allocation11 + $0x30] sm:$0xff]
      %v604 = vld [vmem:[#allocation11 + $0x38] sm:$0xff]
      %v605 = vld [vmem:[#allocation11 + $0x40] sm:$0xff]
      %v606 = vld [vmem:[#allocation11 + $0x48] sm:$0xff]
      %v607 = vld [vmem:[#allocation11 + $0x50] sm:$0xff]
      %v608 = vld [vmem:[#allocation11 + $0x58] sm:$0xff]
      %v609 = vld [vmem:[#allocation11 + $0x60] sm:$0xff]
      %v610 = vld [vmem:[#allocation11 + $0x68] sm:$0xff]
      %v611 = vld [vmem:[#allocation11 + $0x70] sm:$0xff]
      %v612 = vld [vmem:[#allocation11 + $0x78] sm:$0xff]
      %v613 = vmul.f32 %v581, %v597
      %v614 = vmul.f32 %v582, %v598
      %v615 = vmul.f32 %v583, %v599
      %v616 = vmul.f32 %v584, %v600
      %v617 = vmul.f32 %v585, %v601
      %v618 = vmul.f32 %v586, %v602
      %v619 = vmul.f32 %v587, %v603
      %v620 = vmul.f32 %v588, %v604
      %v621 = vmul.f32 %v589, %v605
      %v622 = vmul.f32 %v590, %v606
      %v623 = vmul.f32 %v591, %v607
      %v624 = vmul.f32 %v592, %v608
      %v625 = vmul.f32 %v593, %v609
      %v626 = vmul.f32 %v594, %v610
      %v627 = vmul.f32 %v595, %v611
      %v628 = vmul.f32 %v596, %v612
      %v629 = vpack.c.bf16 %v614, %v613
      %v630 = vpack.c.bf16 %v616, %v615
      %v631 = vpack.c.bf16 %v618, %v617
      %v632 = vpack.c.bf16 %v620, %v619
      %v633 = vpack.c.bf16 %v622, %v621
      %v634 = vpack.c.bf16 %v624, %v623
      %v635 = vpack.c.bf16 %v626, %v625
      %v636 = vpack.c.bf16 %v628, %v627
      %v637 = vld [vmem:[#allocation9] sm:$0xf]
      %v638 = vld [vmem:[#allocation9 + $0x4] sm:$0xf]
      %v639 = vld [vmem:[#allocation9 + $0x8] sm:$0xf]
      %v640 = vld [vmem:[#allocation9 + $0xc] sm:$0xf]
      %v641 = vld [vmem:[#allocation9 + $0x10] sm:$0xf]
      %v642 = vld [vmem:[#allocation9 + $0x14] sm:$0xf]
      %v643 = vld [vmem:[#allocation9 + $0x18] sm:$0xf]
      %v644 = vld [vmem:[#allocation9 + $0x1c] sm:$0xf]
      %v645 = vld [vmem:[#allocation9 + $0x20] sm:$0xf]
      %v646 = vld [vmem:[#allocation9 + $0x24] sm:$0xf]
      %v647 = vld [vmem:[#allocation9 + $0x28] sm:$0xf]
      %v648 = vld [vmem:[#allocation9 + $0x2c] sm:$0xf]
      %v649 = vld [vmem:[#allocation9 + $0x30] sm:$0xf]
      %v650 = vld [vmem:[#allocation9 + $0x34] sm:$0xf]
      %v651 = vld [vmem:[#allocation9 + $0x38] sm:$0xf]
      %v652 = vld [vmem:[#allocation9 + $0x3c] sm:$0xf]
      %v669 = vunpack.c.l.b16 %v637
      %v670 = vunpack.c.l.b16 %v638
      %v671 = vunpack.c.l.b16 %v639
      %v672 = vunpack.c.l.b16 %v640
      %v673 = vunpack.c.l.b16 %v641
      %v674 = vunpack.c.l.b16 %v642
      %v675 = vunpack.c.l.b16 %v643
      %v676 = vunpack.c.l.b16 %v644
      %v677 = vunpack.c.l.b16 %v645
      %v678 = vunpack.c.l.b16 %v646
      %v679 = vunpack.c.l.b16 %v647
      %v680 = vunpack.c.l.b16 %v648
      %v681 = vunpack.c.l.b16 %v649
      %v682 = vunpack.c.l.b16 %v650
      %v683 = vunpack.c.l.b16 %v651
      %v684 = vunpack.c.l.b16 %v652
      %v685 = vpack.c.b16 %v670, %v669
      %v686 = vpack.c.b16 %v672, %v671
      %v687 = vpack.c.b16 %v674, %v673
      %v688 = vpack.c.b16 %v676, %v675
      %v689 = vpack.c.b16 %v678, %v677
      %v690 = vpack.c.b16 %v680, %v679
      %v691 = vpack.c.b16 %v682, %v681
      %v692 = vpack.c.b16 %v684, %v683
      %701 = vmatprep.subr.bf16.mxu0 0
      %702 = vmatpush1.bf16.msra.mxu0 %v685
      %703 = vmatprep.subr.bf16.mxu0 0
      %704 = vmatpush1.bf16.msra.mxu0 %v686
      %705 = vmatprep.subr.bf16.mxu0 0
      %706 = vmatpush1.bf16.msra.mxu0 %v687
      %707 = vmatprep.subr.bf16.mxu0 0
      %708 = vmatpush1.bf16.msra.mxu0 %v688
      %709 = vmatprep.subr.bf16.mxu0 0
      %710 = vmatpush1.bf16.msra.mxu0 %v689
      %711 = vmatprep.subr.bf16.mxu0 0
      %712 = vmatpush1.bf16.msra.mxu0 %v690
      %713 = vmatprep.subr.bf16.mxu0 0
      %714 = vmatpush1.bf16.msra.mxu0 %v691
      %715 = vmatprep.subr.bf16.mxu0 0
      %716 = vmatpush1.bf16.msra.mxu0 %v692
      %717 = vmatprep.subr.bf16.mxu0 0
      %718 = vmatpush1.bf16.msra.mxu0 0
      %719 = vmatprep.subr.bf16.mxu0 0
      %720 = vmatpush1.bf16.msra.mxu0 0
      %721 = vmatprep.subr.bf16.mxu0 0
      %722 = vmatpush1.bf16.msra.mxu0 0
      %723 = vmatprep.subr.bf16.mxu0 0
      %724 = vmatpush1.bf16.msra.mxu0 0
      %725 = vmatprep.subr.bf16.mxu0 0
      %726 = vmatpush1.bf16.msra.mxu0 0
      %727 = vmatprep.subr.bf16.mxu0 0
      %728 = vmatpush1.bf16.msra.mxu0 0
      %729 = vmatprep.subr.bf16.mxu0 0
      %730 = vmatpush1.bf16.msra.mxu0 0
      %731 = vmatprep.subr.bf16.mxu0 0
      %732 = vmatpush1.bf16.msra.mxu0 0
      %733 = vmatprep.mubr.bf16.mxu0 0
      %734 = vmatmul.mubr.bf16.gmra.mrb[0].mxu0 %v629
      %v735 = vpop.f32.mrb[0].mxu0
      %v736 = vadd.f32 0.0, %v735
      %v737 = vpop.f32.mrb[0].mxu0
      %v738 = vpop.f32.mrb[0].mxu0
      %v739 = vadd.f32 0.0, %v738
      %v740 = vpop.f32.mrb[0].mxu0
      %741 = vmatprep.mubr.bf16.mxu0 0
      %742 = vmatmul.mubr.bf16.gmra.mrb[0].mxu0 %v630
      %v743 = vpop.f32.mrb[0].mxu0
      %v744 = vadd.f32 0.0, %v743
      %v745 = vpop.f32.mrb[0].mxu0
      %v746 = vpop.f32.mrb[0].mxu0
      %v747 = vadd.f32 0.0, %v746
      %v748 = vpop.f32.mrb[0].mxu0
      %749 = vmatprep.mubr.bf16.mxu0 0
      %750 = vmatmul.mubr.bf16.gmra.mrb[0].mxu0 %v631
      %v751 = vpop.f32.mrb[0].mxu0
      %v752 = vadd.f32 0.0, %v751
      %v753 = vpop.f32.mrb[0].mxu0
      %v754 = vpop.f32.mrb[0].mxu0
      %v755 = vadd.f32 0.0, %v754
      %v756 = vpop.f32.mrb[0].mxu0
      %757 = vmatprep.mubr.bf16.mxu0 0
      %758 = vmatmul.mubr.bf16.gmra.mrb[0].mxu0 %v632
      %v759 = vpop.f32.mrb[0].mxu0
      %v760 = vadd.f32 0.0, %v759
      %v761 = vpop.f32.mrb[0].mxu0
      %v762 = vpop.f32.mrb[0].mxu0
      %v763 = vadd.f32 0.0, %v762
      %v764 = vpop.f32.mrb[0].mxu0
      %765 = vmatprep.mubr.bf16.mxu0 0
      %766 = vmatmul.mubr.bf16.gmra.mrb[0].mxu0 %v633
      %v767 = vpop.f32.mrb[0].mxu0
      %v768 = vadd.f32 0.0, %v767
      %v769 = vpop.f32.mrb[0].mxu0
      %v770 = vpop.f32.mrb[0].mxu0
      %v771 = vadd.f32 0.0, %v770
      %v772 = vpop.f32.mrb[0].mxu0
      %773 = vmatprep.mubr.bf16.mxu0 0
      %774 = vmatmul.mubr.bf16.gmra.mrb[0].mxu0 %v634
      %v775 = vpop.f32.mrb[0].mxu0
      %v776 = vadd.f32 0.0, %v775
      %v777 = vpop.f32.mrb[0].mxu0
      %v778 = vpop.f32.mrb[0].mxu0
      %v779 = vadd.f32 0.0, %v778
      %v780 = vpop.f32.mrb[0].mxu0
      %781 = vmatprep.mubr.bf16.mxu0 0
      %782 = vmatmul.mubr.bf16.gmra.mrb[0].mxu0 %v635
      %v783 = vpop.f32.mrb[0].mxu0
      %v784 = vadd.f32 0.0, %v783
      %v785 = vpop.f32.mrb[0].mxu0
      %v786 = vpop.f32.mrb[0].mxu0
      %v787 = vadd.f32 0.0, %v786
      %v788 = vpop.f32.mrb[0].mxu0
      %789 = vmatprep.mubr.bf16.mxu0 0
      %790 = vmatmul.mubr.bf16.gmra.mrb[0].mxu0 %v636
      %v791 = vpop.f32.mrb[0].mxu0
      %v792 = vadd.f32 0.0, %v791
      %v793 = vpop.f32.mrb[0].mxu0
      %v794 = vpop.f32.mrb[0].mxu0
      %v795 = vadd.f32 0.0, %v794
      %v796 = vpop.f32.mrb[0].mxu0
      %797 = vdwg.mxu0
      %v798 = vpack.c.bf16 %v739, %v736
      %v799 = vpack.c.bf16 %v747, %v744
      %v800 = vpack.c.bf16 %v755, %v752
      %v801 = vpack.c.bf16 %v763, %v760
      %v802 = vpack.c.bf16 %v771, %v768
      %v803 = vpack.c.bf16 %v779, %v776
      %v804 = vpack.c.bf16 %v787, %v784
      %v805 = vpack.c.bf16 %v795, %v792
      %v814 = vunpack.c.l.b16 %v798
      %v815 = vunpack.c.h.b16 %v798
      %v816 = vunpack.c.l.b16 %v799
      %v817 = vunpack.c.h.b16 %v799
      %v818 = vunpack.c.l.b16 %v800
      %v819 = vunpack.c.h.b16 %v800
      %v820 = vunpack.c.l.b16 %v801
      %v821 = vunpack.c.h.b16 %v801
      %v822 = vunpack.c.l.b16 %v802
      %v823 = vunpack.c.h.b16 %v802
      %v824 = vunpack.c.l.b16 %v803
      %v825 = vunpack.c.h.b16 %v803
      %v826 = vunpack.c.l.b16 %v804
      %v827 = vunpack.c.h.b16 %v804
      %v828 = vunpack.c.l.b16 %v805
      %v829 = vunpack.c.h.b16 %v805
      %v830 = vpack.c.b16 %v814, %v814
      %v831 = vpack.c.b16 %v815, %v815
      %v832 = vpack.c.b16 %v816, %v816
      %v833 = vpack.c.b16 %v817, %v817
      %v834 = vpack.c.b16 %v818, %v818
      %v835 = vpack.c.b16 %v819, %v819
      %v836 = vpack.c.b16 %v820, %v820
      %v837 = vpack.c.b16 %v821, %v821
      %v838 = vpack.c.b16 %v822, %v822
      %v839 = vpack.c.b16 %v823, %v823
      %v840 = vpack.c.b16 %v824, %v824
      %v841 = vpack.c.b16 %v825, %v825
      %v842 = vpack.c.b16 %v826, %v826
      %v843 = vpack.c.b16 %v827, %v827
      %v844 = vpack.c.b16 %v828, %v828
      %v845 = vpack.c.b16 %v829, %v829
      %862 = vst [vmem:[#allocation12] sm:$0xf] %v830
      %863 = vst [vmem:[#allocation12 + $0x4] sm:$0xf] %v831
      %864 = vst [vmem:[#allocation12 + $0x8] sm:$0xf] %v832
      %865 = vst [vmem:[#allocation12 + $0xc] sm:$0xf] %v833
      %866 = vst [vmem:[#allocation12 + $0x10] sm:$0xf] %v834
      %867 = vst [vmem:[#allocation12 + $0x14] sm:$0xf] %v835
      %868 = vst [vmem:[#allocation12 + $0x18] sm:$0xf] %v836
      %869 = vst [vmem:[#allocation12 + $0x1c] sm:$0xf] %v837
      %870 = vst [vmem:[#allocation12 + $0x20] sm:$0xf] %v838
      %871 = vst [vmem:[#allocation12 + $0x24] sm:$0xf] %v839
      %872 = vst [vmem:[#allocation12 + $0x28] sm:$0xf] %v840
      %873 = vst [vmem:[#allocation12 + $0x2c] sm:$0xf] %v841
      %874 = vst [vmem:[#allocation12 + $0x30] sm:$0xf] %v842
      %875 = vst [vmem:[#allocation12 + $0x34] sm:$0xf] %v843
      %876 = vst [vmem:[#allocation12 + $0x38] sm:$0xf] %v844
      %877 = vst [vmem:[#allocation12 + $0x3c] sm:$0xf] %v845
    $region53: #{tpu_custom_call.1} parent=1 // pred_fallthru
      _
    // Predicated region
    $region54: #{tpu_custom_call.1} parent=1 // pred_check
      _
    $region55: #{tpu_custom_call.1} parent=1 // pred_check_branch
      %879 = sbr.rel (0) target = $region57
    $region56: #{tpu_custom_call.1} parent=1 // pred_region
      %s881 = ssub.s32 1024, 1024
      %882 = vsyncadd [#allocation5], %s881
      %s883 = sshll.u32 [#allocation12], 4
      %s884 = int_to_ptr.vmem [resolvable:$true] %s883
      %889 = dma.vmem_to_hbm [thread:$0]  %s884, 1024, %s6, [#allocation5], 64, 64, 4
    $region57: #{tpu_custom_call.1} parent=1 // pred_fallthru
      _
    // Predicated region
    $region58: #{tpu_custom_call.1} parent=1 // pred_check
      _
    $region59: #{tpu_custom_call.1} parent=1 // pred_check_branch
      %891 = sbr.rel (0) target = $region61
    $region60: #{tpu_custom_call.1} parent=1 // pred_region
      %892 = dma.done [#allocation5], 1024
    $region61: #{tpu_custom_call.1} parent=1 // pred_fallthru
      _
    %893 = vsyncpa [#allocation4], 1
    %894 = vsyncpa [#allocation7], 1
    %895 = vsyncpa [#allocation10], 1
    %896 = vsyncpa [#allocation5], 1

</llo_original>
